<compile_context>
chip_gen: v6e
topology: v6e:2x2x1
jax: 0.10.0
libtpu: 0.0.40
codegen_flags: <defaults>
</compile_context>

<pallas_src>
import functools

import jax
import jax.numpy as jnp
from jax.experimental import pallas as pl
from jax.experimental.pallas import tpu as pltpu


def _round_up(x, m):
    return (x + m - 1) // m * m


def _vmem_capacity_bytes():
    """Generation-aware VMEM capacity (v5e/v6e: 128 MiB, v7x: 64 MiB per TC)."""
    try:
        cap = getattr(pltpu.get_tpu_info(), "vmem_capacity_bytes", None)
        if cap:
            return int(cap)
    except Exception:
        pass
    return 64 * 1024 * 1024  # conservative fallback = v7x per-TensorCore VMEM


def _vq_fused_kernel(x_ref, cbt_ref, e_sq_ref, cb_ref, ewb_ref,
                     quant_ref, dec_ref, idx_ref, sse_ref,
                     *, dist_in_bf16, decoder_half_bf16):
    x = x_ref[...].astype(jnp.float32)                 # (tm, D); no-op for f32 input

    # ---- nearest-codeword search (MXU) -----------------------------------------
    # cbt = -2 * E^T (pre-scaled / pre-transposed in the wrapper):
    #   dist = ||e||^2 - 2 x.e    (||x||^2 is a per-row constant -> dropped)
    xd = x.astype(jnp.bfloat16) if dist_in_bf16 else x
    scores = jnp.dot(xd, cbt_ref[...], preferred_element_type=jnp.float32)   # (tm, K)
    dist = e_sq_ref[...] + scores                                            # (tm, K)

    tm, K = dist.shape
    idx = jnp.argmin(dist, axis=-1).astype(jnp.int32)                        # (tm,)
    idx_ref[...] = idx.reshape(1, tm)                  # lane-dense store

    # ---- one-hot gathers (MXU) ---------------------------------------------------
    hit = idx[:, None] == jax.lax.broadcasted_iota(jnp.int32, (tm, K), 1)

    # quant half in f32: exact one-hot row-gather of the codebook.
    quant = jnp.dot(hit.astype(jnp.float32), cb_ref[...],
                    preferred_element_type=jnp.float32)                      # (tm, D)
    quant_ref[...] = quant

    # decoder half = in_linear(quant) = one-hot @ (E @ W + b); bias folded in the
    # wrapper.  bf16 operands with f32 accumulate when decoder_half_bf16.
    oh_dec = hit.astype(jnp.bfloat16) if decoder_half_bf16 else hit.astype(jnp.float32)
    dec = jnp.dot(oh_dec, ewb_ref[...], preferred_element_type=jnp.float32)  # (tm, H)
    dec_ref[...] = dec

    # ---- per-row commitment SSE (lane-dense store; reduced in the wrapper) -------
    d = quant - x
    sse_ref[...] = jnp.sum(d * d, axis=-1).reshape(1, tm)


@functools.partial(
    jax.jit,
    static_argnames=("tm", "dist_in_bf16", "decoder_half_bf16",
                     "single_buffer_residents"))
def kmeans_vqgan_emb_forward(emb, emb_length, codebook_kd, w_in, b_in, *,
                             tm=256, dist_in_bf16=False, decoder_half_bf16=True,
                             single_buffer_residents=True):
    """Pallas implementation of KMeansVQGANEmb.forward hot path.

    emb:         (B, T, D) float32 / bfloat16
    emb_length:  (B,) int32 (carried through; VQ runs with update=False)
    codebook_kd: (K, D) float32  (k-means cluster centers, row per codeword)
    w_in:        (D, H) float32  (in_linear weight, transposed from torch (H, D))
    b_in:        (H,)   float32
    tm:          row tile (multiple of 8; sweep 256-1024 for production shapes)
    """
    B, T, D = emb.shape
    K = codebook_kd.shape[0]
    H = w_in.shape[1]
    M = B * T

    # Clamp the tile for small batches (avoid mostly-padded tiles).
    tm = max(8, min(tm, _round_up(M, 8)))
    num_tiles = pl.cdiv(M, tm)
    M_pad = num_tiles * tm

    x = emb.reshape(M, D)                     # keep native dtype; upcast in-kernel
    if M_pad != M:
        x = jnp.pad(x, ((0, M_pad - M), (0, 0)))

    # ---- hoisted, loop-invariant precompute (wrapper / XLA) ----------------------
    cb = codebook_kd.astype(jnp.float32)                                    # (K, D)
    cbt = (-2.0 * cb).T                                                     # (D, K)
    if dist_in_bf16:
        cbt = cbt.astype(jnp.bfloat16)
    e_sq = jnp.sum(cb * cb, axis=-1)[None, :]                               # (1, K)
    ewb = (jnp.dot(cb, w_in.astype(jnp.float32),
                   preferred_element_type=jnp.float32)
           + b_in.astype(jnp.float32)[None, :])                             # (K, H)
    if decoder_half_bf16:
        ewb = ewb.astype(jnp.bfloat16)

    # Resident (grid-invariant) operands: request single-buffering so the pipeline
    # does not allocate 2x VMEM for data that never changes across grid steps.
    resident_kwargs = (dict(pipeline_mode=pl.Buffered(1))
                       if single_buffer_residents else {})

    def _resident(shape):
        return pl.BlockSpec(shape, lambda i: (0, 0), **resident_kwargs)

    # ---- generation-derived VMEM budget ------------------------------------------
    res_bytes = (cbt.size * cbt.dtype.itemsize + e_sq.size * 4
                 + cb.size * 4 + ewb.size * ewb.dtype.itemsize)
    res_bytes *= 1 if single_buffer_residents else 2
    stream_bytes = 2 * (tm * D * x.dtype.itemsize        # x (double-buffered)
                        + tm * D * 4 + tm * H * 4        # quant, dec
                        + 2 * tm * 4)                    # idx, sse
    temp_bytes = 6 * tm * K * 4                          # scores/dist/one-hot temporaries
    needed = res_bytes + stream_bytes + temp_bytes
    vmem_limit = int(min(_vmem_capacity_bytes(),
                         max(32 * 1024 * 1024, 2 * needed)))

    quant_out, dec_out, idx_out, sse_out = pl.pallas_call(
        functools.partial(_vq_fused_kernel,
                          dist_in_bf16=dist_in_bf16,
                          decoder_half_bf16=decoder_half_bf16),
        out_shape=(
            jax.ShapeDtypeStruct((M_pad, D), jnp.float32),       # quant
            jax.ShapeDtypeStruct((M_pad, H), jnp.float32),       # in_linear(quant)
            jax.ShapeDtypeStruct((num_tiles, tm), jnp.int32),    # indices (lane-dense)
            jax.ShapeDtypeStruct((num_tiles, tm), jnp.float32),  # per-row SSE
        ),
        grid_spec=pltpu.PrefetchScalarGridSpec(
            num_scalar_prefetch=0,
            grid=(num_tiles,),
            in_specs=[
                pl.BlockSpec((tm, D), lambda i: (i, 0)),   # x tile (streamed)
                _resident((D, K)),                         # -2 * E^T
                _resident((1, K)),                         # ||e||^2
                _resident((K, D)),                         # E  (quant gather)
                _resident((K, H)),                         # E @ W + b
            ],
            out_specs=[
                pl.BlockSpec((tm, D), lambda i: (i, 0)),
                pl.BlockSpec((tm, H), lambda i: (i, 0)),
                pl.BlockSpec((1, tm), lambda i: (i, 0)),
                pl.BlockSpec((1, tm), lambda i: (i, 0)),
            ],
        ),
        compiler_params=pltpu.CompilerParams(
            # No cross-step state -> row-tile axis is embarrassingly parallel
            # (shards across v7x's 2 TensorCores; harmless on v5e/v6e).
            dimension_semantics=("parallel",),
            vmem_limit_bytes=vmem_limit,
        ),
    )(x, cbt, e_sq, cb, ewb)

    quant = quant_out[:M].reshape(B, T, D)
    decoder_inputs = dec_out[:M].reshape(B, T, H)
    indices = idx_out.reshape(M_pad)[:M].reshape(B, T)
    diff = jnp.sum(sse_out.reshape(M_pad)[:M]) / jnp.float32(M * D)  # .pow(2).mean()

    output_dict = {
        # matches KMeansVQGANEmb.forward / KMeansQuantizer.forward structure
        "encoder_indices": (indices,),
        "quantizer_outputs": (quant,),
        "quantizer_diffs": (diff,),
        "quantizer_lengths": [emb_length],
        "residual_output": None,
        "predictor_diffs": None,
        "decoder_inputs": decoder_inputs,          # output of self.in_linear
        # TODO(synk): 'decoder_outputs' (HifiGANGenerator) not implemented — class
        # and config not provided in the reference snippet.
    }
    return output_dict


def _reference(emb, codebook_kd, w_in, b_in):
    """Pure-JAX reference of the same math (for correctness check)."""
    B, T, D = emb.shape
    H = w_in.shape[1]
    x = emb.reshape(-1, D).astype(jnp.float32)
    cb = codebook_kd.astype(jnp.float32)
    dist = (jnp.sum(x * x, -1, keepdims=True)
            - 2.0 * x @ cb.T
            + jnp.sum(cb * cb, -1)[None, :])
    idx = jnp.argmin(dist, -1)
    quant = cb[idx]
    diff = jnp.mean((quant - x) ** 2)
    dec_f32 = quant @ w_in + b_in[None, :]
    # what the bf16 decoder half computes exactly: row gather from bf16(E@W + b)
    ewb_bf16 = (cb @ w_in + b_in[None, :]).astype(jnp.bfloat16)
    dec_bf16 = ewb_bf16[idx].astype(jnp.float32)
    return (quant.reshape(B, T, D), idx.reshape(B, T), diff,
            dec_f32.reshape(B, T, H), dec_bf16.reshape(B, T, H))


if __name__ == "__main__":
    # Small, deterministic synthetic setup consistent with the module:
    #   emb_dim = 32, n_model_size = 32, k-means codebook with 64 centers.
    B, T, D, K, H = 2, 8, 32, 64, 32

    key = jax.random.PRNGKey(0)
    k_emb, k_cb, k_w, k_b = jax.random.split(key, 4)

    emb = jax.random.normal(k_emb, (B, T, D), dtype=jnp.float32)
    emb_length = jnp.array([T, T - 2], dtype=jnp.int32)

    # "codewords = Tensor(cluster_centers_).T" -> we keep the row-per-center form.
    codebook_kd = jax.random.normal(k_cb, (K, D), dtype=jnp.float32)
    # nn.Linear(emb_dim, n_model_size): torch weight (H, D); we store W^T = (D, H).
    w_in = (jax.random.normal(k_w, (D, H), dtype=jnp.float32)
            / jnp.sqrt(jnp.float32(D)))
    b_in = jax.random.normal(k_b, (H,), dtype=jnp.float32) * 0.01

    try:
        out = kmeans_vqgan_emb_forward(emb, emb_length, codebook_kd, w_in, b_in)
        out = jax.block_until_ready(out)
    except Exception:
        # Compatibility guard: if this jax/jaxlib rejects pl.Buffered on top-level
        # pallas_call operands, fall back to default double-buffered residents.
        out = kmeans_vqgan_emb_forward(emb, emb_length, codebook_kd, w_in, b_in,
                                       single_buffer_residents=False)
        out = jax.block_until_ready(out)

    # correctness check against pure-JAX reference
    q_ref, i_ref, d_ref, dec_f32, dec_bf16 = _reference(emb, codebook_kd, w_in, b_in)
    assert jnp.array_equal(out["encoder_indices"][0], i_ref)
    assert jnp.allclose(out["quantizer_outputs"][0], q_ref, atol=1e-5)
    assert jnp.allclose(out["quantizer_diffs"][0], d_ref, atol=1e-5)
    # decoder half uses bf16 operands (f32 accumulate): near-exact vs the
    # bf16(E@W+b) gather, bf16-rounding-level vs the pure-f32 linear.
    assert jnp.allclose(out["decoder_inputs"], dec_bf16, atol=1e-2)
    assert jnp.allclose(out["decoder_inputs"], dec_f32, atol=5e-2)

    print("KERNEL_OK")
</pallas_src>

<mosaic_0001>
module attributes {stable_mosaic.version = 11 : i64} {
  func.func @_vq_fused_kernel(%arg0: i32, %arg1: memref<16x32xf32, #tpu.memory_space<vmem>>, %arg2: memref<32x64xf32, #tpu.memory_space<vmem>>, %arg3: memref<1x64xf32, #tpu.memory_space<vmem>>, %arg4: memref<64x32xf32, #tpu.memory_space<vmem>>, %arg5: memref<64x32xbf16, #tpu.memory_space<vmem>>, %arg6: memref<16x32xf32, #tpu.memory_space<vmem>>, %arg7: memref<16x32xf32, #tpu.memory_space<vmem>>, %arg8: memref<1x16xi32, #tpu.memory_space<vmem>>, %arg9: memref<1x16xf32, #tpu.memory_space<vmem>>) attributes {dimension_semantics = [#tpu.dimension_semantics<parallel>], iteration_bounds = array<i64: 1>, scalar_prefetch = 0 : i64, scratch_operands = 0 : i64, tpu.core_type = #tpu.core_type<tc>, window_params = [{transform_indices = @transform_0, window_bounds = array<i64: 16, 32>}, {pipeline_mode = #tpu.pipeline_mode<synchronous>, transform_indices = @transform_1, window_bounds = array<i64: 32, 64>}, {pipeline_mode = #tpu.pipeline_mode<synchronous>, transform_indices = @transform_2, window_bounds = array<i64: 1, 64>}, {pipeline_mode = #tpu.pipeline_mode<synchronous>, transform_indices = @transform_3, window_bounds = array<i64: 64, 32>}, {pipeline_mode = #tpu.pipeline_mode<synchronous>, transform_indices = @transform_4, window_bounds = array<i64: 64, 32>}, {transform_indices = @transform_5, window_bounds = array<i64: 16, 32>}, {transform_indices = @transform_6, window_bounds = array<i64: 16, 32>}, {transform_indices = @transform_7, window_bounds = array<i64: 1, 16>}, {transform_indices = @transform_8, window_bounds = array<i64: 1, 16>}]} {
    %c0 = arith.constant 0 : index
    %c0_0 = arith.constant 0 : index
    %0 = vector.load %arg1[%c0, %c0_0] : memref<16x32xf32, #tpu.memory_space<vmem>>, vector<16x32xf32>
    %c0_1 = arith.constant 0 : index
    %c0_2 = arith.constant 0 : index
    %1 = vector.load %arg2[%c0_1, %c0_2] : memref<32x64xf32, #tpu.memory_space<vmem>>, vector<32x64xf32>
    %cst = arith.constant dense<0.000000e+00> : vector<16x64xf32>
    %2 = tpu.matmul %0, %1, %cst {dimension_numbers = #tpu.dot_dimension_numbers<[1], [0], [0], [1], [0, 0, 1, 1], [], []>} : vector<16x32xf32>, vector<32x64xf32>, vector<16x64xf32> -> vector<16x64xf32>
    %c0_3 = arith.constant 0 : index
    %c0_4 = arith.constant 0 : index
    %3 = vector.load %arg3[%c0_3, %c0_4] : memref<1x64xf32, #tpu.memory_space<vmem>>, vector<1x64xf32>
    %4 = vector.broadcast %3 : vector<1x64xf32> to vector<16x64xf32>
    %5 = arith.addf %4, %2 : vector<16x64xf32>
    %6 = tpu.reduce_index %5 {axis = 1 : i32, kind = #tpu.reduction_kind<arg_min>} : vector<16x64xf32> -> vector<16xi32>
    %7 = vector.shape_cast %6 : vector<16xi32> to vector<1x16xi32>
    %c0_5 = arith.constant 0 : index
    %c0_6 = arith.constant 0 : index
    %8 = vector.load %arg8[%c0_5, %c0_6] : memref<1x16xi32, #tpu.memory_space<vmem>>, vector<1x16xi32>
    tpu.vector_store %arg8[%c0_5, %c0_6], %7 {strides = array<i32>} : memref<1x16xi32, #tpu.memory_space<vmem>>, vector<1x16xi32>,
    %9 = vector.shape_cast %6 : vector<16xi32> to vector<16x1xi32>
    %10 = tpu.iota {dimensions = array<i32: 1>} : vector<16x64xi32>
    %11 = vector.broadcast %9 : vector<16x1xi32> to vector<16x64xi32>
    %12 = arith.cmpi eq, %11, %10 : vector<16x64xi32>
    %13 = arith.extui %12 : vector<16x64xi1> to vector<16x64xi32>
    %14 = arith.sitofp %13 : vector<16x64xi32> to vector<16x64xf32>
    %c0_7 = arith.constant 0 : index
    %c0_8 = arith.constant 0 : index
    %15 = vector.load %arg4[%c0_7, %c0_8] : memref<64x32xf32, #tpu.memory_space<vmem>>, vector<64x32xf32>
    %cst_9 = arith.constant dense<0.000000e+00> : vector<16x32xf32>
    %16 = tpu.matmul %14, %15, %cst_9 {dimension_numbers = #tpu.dot_dimension_numbers<[1], [0], [0], [1], [0, 0, 1, 1], [], []>} : vector<16x64xf32>, vector<64x32xf32>, vector<16x32xf32> -> vector<16x32xf32>
    %c0_10 = arith.constant 0 : index
    %c0_11 = arith.constant 0 : index
    %17 = vector.load %arg6[%c0_10, %c0_11] : memref<16x32xf32, #tpu.memory_space<vmem>>, vector<16x32xf32>
    tpu.vector_store %arg6[%c0_10, %c0_11], %16 {strides = array<i32>} : memref<16x32xf32, #tpu.memory_space<vmem>>, vector<16x32xf32>,
    %18 = arith.extui %12 : vector<16x64xi1> to vector<16x64xi32>
    %19 = arith.sitofp %18 : vector<16x64xi32> to vector<16x64xf32>
    %20 = arith.truncf %19 : vector<16x64xf32> to vector<16x64xbf16>
    %c0_12 = arith.constant 0 : index
    %c0_13 = arith.constant 0 : index
    %21 = vector.load %arg5[%c0_12, %c0_13] : memref<64x32xbf16, #tpu.memory_space<vmem>>, vector<64x32xbf16>
    %cst_14 = arith.constant dense<0.000000e+00> : vector<16x32xf32>
    %22 = tpu.matmul %20, %21, %cst_14 {dimension_numbers = #tpu.dot_dimension_numbers<[1], [0], [0], [1], [0, 0, 1, 1], [], []>} : vector<16x64xbf16>, vector<64x32xbf16>, vector<16x32xf32> -> vector<16x32xf32>
    %c0_15 = arith.constant 0 : index
    %c0_16 = arith.constant 0 : index
    %23 = vector.load %arg7[%c0_15, %c0_16] : memref<16x32xf32, #tpu.memory_space<vmem>>, vector<16x32xf32>
    tpu.vector_store %arg7[%c0_15, %c0_16], %22 {strides = array<i32>} : memref<16x32xf32, #tpu.memory_space<vmem>>, vector<16x32xf32>,
    %24 = arith.subf %16, %0 : vector<16x32xf32>
    %25 = arith.mulf %24, %24 : vector<16x32xf32>
    %cst_17 = arith.constant dense<0.000000e+00> : vector<16xf32>
    %26 = vector.multi_reduction <add>, %25, %cst_17 [1] : vector<16x32xf32> to vector<16xf32>
    %27 = vector.shape_cast %26 : vector<16xf32> to vector<1x16xf32>
    %c0_18 = arith.constant 0 : index
    %c0_19 = arith.constant 0 : index
    %28 = vector.load %arg9[%c0_18, %c0_19] : memref<1x16xf32, #tpu.memory_space<vmem>>, vector<1x16xf32>
    tpu.vector_store %arg9[%c0_18, %c0_19], %27 {strides = array<i32>} : memref<1x16xf32, #tpu.memory_space<vmem>>, vector<1x16xf32>,
    return
  }
  func.func @transform_0(%arg0: i32) -> (i32, i32) {
    %c0_i32 = arith.constant 0 : i32
    %c0_i32_0 = arith.constant 0 : i32
    return %arg0, %c0_i32 : i32, i32
  }
  func.func @transform_1(%arg0: i32) -> (i32, i32) {
    %c0_i32 = arith.constant 0 : i32
    %c0_i32_0 = arith.constant 0 : i32
    %c0_i32_1 = arith.constant 0 : i32
    return %c0_i32, %c0_i32_0 : i32, i32
  }
  func.func @transform_2(%arg0: i32) -> (i32, i32) {
    %c0_i32 = arith.constant 0 : i32
    %c0_i32_0 = arith.constant 0 : i32
    %c0_i32_1 = arith.constant 0 : i32
    return %c0_i32, %c0_i32_0 : i32, i32
  }
  func.func @transform_3(%arg0: i32) -> (i32, i32) {
    %c0_i32 = arith.constant 0 : i32
    %c0_i32_0 = arith.constant 0 : i32
    %c0_i32_1 = arith.constant 0 : i32
    return %c0_i32, %c0_i32_0 : i32, i32
  }
  func.func @transform_4(%arg0: i32) -> (i32, i32) {
    %c0_i32 = arith.constant 0 : i32
    %c0_i32_0 = arith.constant 0 : i32
    %c0_i32_1 = arith.constant 0 : i32
    return %c0_i32, %c0_i32_0 : i32, i32
  }
  func.func @transform_5(%arg0: i32) -> (i32, i32) {
    %c0_i32 = arith.constant 0 : i32
    %c0_i32_0 = arith.constant 0 : i32
    return %arg0, %c0_i32 : i32, i32
  }
  func.func @transform_6(%arg0: i32) -> (i32, i32) {
    %c0_i32 = arith.constant 0 : i32
    %c0_i32_0 = arith.constant 0 : i32
    return %arg0, %c0_i32 : i32, i32
  }
  func.func @transform_7(%arg0: i32) -> (i32, i32) {
    %c0_i32 = arith.constant 0 : i32
    %c0_i32_0 = arith.constant 0 : i32
    return %arg0, %c0_i32 : i32, i32
  }
  func.func @transform_8(%arg0: i32) -> (i32, i32) {
    %c0_i32 = arith.constant 0 : i32
    %c0_i32_0 = arith.constant 0 : i32
    return %arg0, %c0_i32 : i32, i32
  }
}

module attributes {stable_mosaic.version = 11 : i64} {
  func.func @_vq_fused_kernel(%arg0: i32, %arg1: memref<16x32xf32, #tpu.memory_space<vmem>>, %arg2: memref<32x64xf32, #tpu.memory_space<vmem>>, %arg3: memref<1x64xf32, #tpu.memory_space<vmem>>, %arg4: memref<64x32xf32, #tpu.memory_space<vmem>>, %arg5: memref<64x32xbf16, #tpu.memory_space<vmem>>, %arg6: memref<16x32xf32, #tpu.memory_space<vmem>>, %arg7: memref<16x32xf32, #tpu.memory_space<vmem>>, %arg8: memref<1x16xi32, #tpu.memory_space<vmem>>, %arg9: memref<1x16xf32, #tpu.memory_space<vmem>>) attributes {dimension_semantics = [#tpu.dimension_semantics<parallel>], iteration_bounds = array<i64: 1>, scalar_prefetch = 0 : i64, scratch_operands = 0 : i64, tpu.core_type = #tpu.core_type<tc>, window_params = [{transform_indices = @transform_0, window_bounds = array<i64: 16, 32>}, {pipeline_mode = #tpu.pipeline_mode<synchronous>, transform_indices = @transform_1, window_bounds = array<i64: 32, 64>}, {pipeline_mode = #tpu.pipeline_mode<synchronous>, transform_indices = @transform_2, window_bounds = array<i64: 1, 64>}, {pipeline_mode = #tpu.pipeline_mode<synchronous>, transform_indices = @transform_3, window_bounds = array<i64: 64, 32>}, {pipeline_mode = #tpu.pipeline_mode<synchronous>, transform_indices = @transform_4, window_bounds = array<i64: 64, 32>}, {transform_indices = @transform_5, window_bounds = array<i64: 16, 32>}, {transform_indices = @transform_6, window_bounds = array<i64: 16, 32>}, {transform_indices = @transform_7, window_bounds = array<i64: 1, 16>}, {transform_indices = @transform_8, window_bounds = array<i64: 1, 16>}]} {
    %c0 = arith.constant 0 : index
    %c0_0 = arith.constant 0 : index
    %0 = vector.load %arg1[%c0, %c0_0] : memref<16x32xf32, #tpu.memory_space<vmem>>, vector<16x32xf32>
    %c0_1 = arith.constant 0 : index
    %c0_2 = arith.constant 0 : index
    %1 = vector.load %arg2[%c0_1, %c0_2] : memref<32x64xf32, #tpu.memory_space<vmem>>, vector<32x64xf32>
    %cst = arith.constant dense<0.000000e+00> : vector<16x64xf32>
    %2 = tpu.matmul %0, %1, %cst {dimension_numbers = #tpu.dot_dimension_numbers<[1], [0], [0], [1], [0, 0, 1, 1], [], []>} : vector<16x32xf32>, vector<32x64xf32>, vector<16x64xf32> -> vector<16x64xf32>
    %c0_3 = arith.constant 0 : index
    %c0_4 = arith.constant 0 : index
    %3 = vector.load %arg3[%c0_3, %c0_4] : memref<1x64xf32, #tpu.memory_space<vmem>>, vector<1x64xf32>
    %4 = vector.broadcast %3 : vector<1x64xf32> to vector<16x64xf32>
    %5 = arith.addf %4, %2 : vector<16x64xf32>
    %6 = tpu.reduce_index %5 {axis = 1 : i32, kind = #tpu.reduction_kind<arg_min>} : vector<16x64xf32> -> vector<16xi32>
    %7 = vector.shape_cast %6 : vector<16xi32> to vector<1x16xi32>
    %c0_5 = arith.constant 0 : index
    %c0_6 = arith.constant 0 : index
    %8 = vector.load %arg8[%c0_5, %c0_6] : memref<1x16xi32, #tpu.memory_space<vmem>>, vector<1x16xi32>
    tpu.vector_store %arg8[%c0_5, %c0_6], %7 {strides = array<i32>} : memref<1x16xi32, #tpu.memory_space<vmem>>, vector<1x16xi32>,
    %9 = vector.shape_cast %6 : vector<16xi32> to vector<16x1xi32>
    %10 = tpu.iota {dimensions = array<i32: 1>} : vector<16x64xi32>
    %11 = vector.broadcast %9 : vector<16x1xi32> to vector<16x64xi32>
    %12 = arith.cmpi eq, %11, %10 : vector<16x64xi32>
    %13 = arith.extui %12 : vector<16x64xi1> to vector<16x64xi32>
    %14 = arith.sitofp %13 : vector<16x64xi32> to vector<16x64xf32>
    %c0_7 = arith.constant 0 : index
    %c0_8 = arith.constant 0 : index
    %15 = vector.load %arg4[%c0_7, %c0_8] : memref<64x32xf32, #tpu.memory_space<vmem>>, vector<64x32xf32>
    %cst_9 = arith.constant dense<0.000000e+00> : vector<16x32xf32>
    %16 = tpu.matmul %14, %15, %cst_9 {dimension_numbers = #tpu.dot_dimension_numbers<[1], [0], [0], [1], [0, 0, 1, 1], [], []>} : vector<16x64xf32>, vector<64x32xf32>, vector<16x32xf32> -> vector<16x32xf32>
    %c0_10 = arith.constant 0 : index
    %c0_11 = arith.constant 0 : index
    %17 = vector.load %arg6[%c0_10, %c0_11] : memref<16x32xf32, #tpu.memory_space<vmem>>, vector<16x32xf32>
    tpu.vector_store %arg6[%c0_10, %c0_11], %16 {strides = array<i32>} : memref<16x32xf32, #tpu.memory_space<vmem>>, vector<16x32xf32>,
    %18 = arith.extui %12 : vector<16x64xi1> to vector<16x64xi32>
    %19 = arith.sitofp %18 : vector<16x64xi32> to vector<16x64xf32>
    %20 = arith.truncf %19 : vector<16x64xf32> to vector<16x64xbf16>
    %c0_12 = arith.constant 0 : index
    %c0_13 = arith.constant 0 : index
    %21 = vector.load %arg5[%c0_12, %c0_13] : memref<64x32xbf16, #tpu.memory_space<vmem>>, vector<64x32xbf16>
    %cst_14 = arith.constant dense<0.000000e+00> : vector<16x32xf32>
    %22 = tpu.matmul %20, %21, %cst_14 {dimension_numbers = #tpu.dot_dimension_numbers<[1], [0], [0], [1], [0, 0, 1, 1], [], []>} : vector<16x64xbf16>, vector<64x32xbf16>, vector<16x32xf32> -> vector<16x32xf32>
    %c0_15 = arith.constant 0 : index
    %c0_16 = arith.constant 0 : index
    %23 = vector.load %arg7[%c0_15, %c0_16] : memref<16x32xf32, #tpu.memory_space<vmem>>, vector<16x32xf32>
    tpu.vector_store %arg7[%c0_15, %c0_16], %22 {strides = array<i32>} : memref<16x32xf32, #tpu.memory_space<vmem>>, vector<16x32xf32>,
    %24 = arith.subf %16, %0 : vector<16x32xf32>
    %25 = arith.mulf %24, %24 : vector<16x32xf32>
    %cst_17 = arith.constant dense<0.000000e+00> : vector<16xf32>
    %26 = vector.multi_reduction <add>, %25, %cst_17 [1] : vector<16x32xf32> to vector<16xf32>
    %27 = vector.shape_cast %26 : vector<16xf32> to vector<1x16xf32>
    %c0_18 = arith.constant 0 : index
    %c0_19 = arith.constant 0 : index
    %28 = vector.load %arg9[%c0_18, %c0_19] : memref<1x16xf32, #tpu.memory_space<vmem>>, vector<1x16xf32>
    tpu.vector_store %arg9[%c0_18, %c0_19], %27 {strides = array<i32>} : memref<1x16xf32, #tpu.memory_space<vmem>>, vector<1x16xf32>,
    return
  }
  func.func @transform_0(%arg0: i32) -> (i32, i32) {
    %c0_i32 = arith.constant 0 : i32
    %c0_i32_0 = arith.constant 0 : i32
    return %arg0, %c0_i32 : i32, i32
  }
  func.func @transform_1(%arg0: i32) -> (i32, i32) {
    %c0_i32 = arith.constant 0 : i32
    %c0_i32_0 = arith.constant 0 : i32
    %c0_i32_1 = arith.constant 0 : i32
    return %c0_i32, %c0_i32_0 : i32, i32
  }
  func.func @transform_2(%arg0: i32) -> (i32, i32) {
    %c0_i32 = arith.constant 0 : i32
    %c0_i32_0 = arith.constant 0 : i32
    %c0_i32_1 = arith.constant 0 : i32
    return %c0_i32, %c0_i32_0 : i32, i32
  }
  func.func @transform_3(%arg0: i32) -> (i32, i32) {
    %c0_i32 = arith.constant 0 : i32
    %c0_i32_0 = arith.constant 0 : i32
    %c0_i32_1 = arith.constant 0 : i32
    return %c0_i32, %c0_i32_0 : i32, i32
  }
  func.func @transform_4(%arg0: i32) -> (i32, i32) {
    %c0_i32 = arith.constant 0 : i32
    %c0_i32_0 = arith.constant 0 : i32
    %c0_i32_1 = arith.constant 0 : i32
    return %c0_i32, %c0_i32_0 : i32, i32
  }
  func.func @transform_5(%arg0: i32) -> (i32, i32) {
    %c0_i32 = arith.constant 0 : i32
    %c0_i32_0 = arith.constant 0 : i32
    return %arg0, %c0_i32 : i32, i32
  }
  func.func @transform_6(%arg0: i32) -> (i32, i32) {
    %c0_i32 = arith.constant 0 : i32
    %c0_i32_0 = arith.constant 0 : i32
    return %arg0, %c0_i32 : i32, i32
  }
  func.func @transform_7(%arg0: i32) -> (i32, i32) {
    %c0_i32 = arith.constant 0 : i32
    %c0_i32_0 = arith.constant 0 : i32
    return %arg0, %c0_i32 : i32, i32
  }
  func.func @transform_8(%arg0: i32) -> (i32, i32) {
    %c0_i32 = arith.constant 0 : i32
    %c0_i32_0 = arith.constant 0 : i32
    return %arg0, %c0_i32 : i32, i32
  }
}

</mosaic_0001>

<llo_original>
// kernel: kmeans_vqgan_emb_forward.1
$region0: #{kmeans_vqgan_emb_forward.1}
  #allocation0 [shape = 'u32[]', space=smem, size = 0x4, offset = 0x4, fixed_abs, tag = 'smem constant byte address 0x4 - core index']
  #allocation1 [shape = 'u32[144,128]{1,0:T(1,128)}', space=vmem, size = 0x12000, scoped, tag = 'internal scratch']
  %s0 = inlined_call_operand.vmem [shape: f32[16,32], index: 0, kind: input, shape index: {}]
  %s1 = inlined_call_operand.vmem [shape: f32[32,64], index: 1, kind: input, shape index: {}]
  %s2 = inlined_call_operand.vmem [shape: f32[1,64], index: 2, kind: input, shape index: {}]
  %s3 = inlined_call_operand.vmem [shape: f32[64,32], index: 3, kind: input, shape index: {}]
  %s4 = inlined_call_operand.vmem [shape: bf16[64,32], index: 4, kind: input, shape index: {}]
  %s5 = inlined_call_operand.hbm [shape: f32[16,32], index: 5, kind: output, shape index: {0}]
  %s6 = inlined_call_operand.hbm [shape: f32[16,32], index: 6, kind: output, shape index: {1}]
  %s7 = inlined_call_operand.vmem [shape: s32[1,16], index: 7, kind: output, shape index: {2}]
  %s8 = inlined_call_operand.vmem [shape: f32[1,16], index: 8, kind: output, shape index: {3}]
  %9 = xla_tuple %s5, %s6, %s7, %s8
  %s10 = sld [smem:[#allocation0]]
  $region54: #{kmeans_vqgan_emb_forward.1} parent=0
    _
  %s12 = ssub.s32 1, %s10
  %s13 = scalar_select 0, %s12, %s10
  $region1: #{kmeans_vqgan_emb_forward.1} parent=0
    #allocation2 [shape = 'u8[8192]{0}', space=vmem, size = 0x2000, scoped, tag = 'output window, operand 0, single buffered']
    #allocation3 [shape = 's32[1]{0}', space=sflag, size = 0x4, scoped, tag = 'scoped memory for kmeans_vqgan_emb_forward.1']
    #allocation4 [shape = 'u8[8192]{0}', space=vmem, size = 0x2000, scoped, tag = 'output window, operand 1, single buffered']
    #allocation5 [shape = 's32[1]{0}', space=sflag, size = 0x4, scoped, tag = 'scoped memory for kmeans_vqgan_emb_forward.1']
    %14 = vsyncpa [#allocation3], 0
    %15 = vsyncpa [#allocation5], 0
    // Predicated region
    $region2: #{kmeans_vqgan_emb_forward.1} parent=1 // pred_check
      _
    $region3: #{kmeans_vqgan_emb_forward.1} parent=1 // pred_check_branch
      %17 = sbr.rel (0) target = $region5
    $region4: #{kmeans_vqgan_emb_forward.1} parent=1 // pred_region
      _
    $region5: #{kmeans_vqgan_emb_forward.1} parent=1 // pred_fallthru
      _
    // Predicated region
    $region6: #{kmeans_vqgan_emb_forward.1} parent=1 // pred_check
      _
    $region7: #{kmeans_vqgan_emb_forward.1} parent=1 // pred_check_branch
      %19 = sbr.rel (0) target = $region9
    $region8: #{kmeans_vqgan_emb_forward.1} parent=1 // pred_region
      _
    $region9: #{kmeans_vqgan_emb_forward.1} parent=1 // pred_fallthru
      _
    // Predicated region
    $region10: #{kmeans_vqgan_emb_forward.1} parent=1 // pred_check
      _
    $region11: #{kmeans_vqgan_emb_forward.1} parent=1 // pred_check_branch
      %21 = sbr.rel (0) target = $region13
    $region12: #{kmeans_vqgan_emb_forward.1} parent=1 // pred_region
      _
    $region13: #{kmeans_vqgan_emb_forward.1} parent=1 // pred_fallthru
      _
    // Predicated region
    $region14: #{kmeans_vqgan_emb_forward.1} parent=1 // pred_check
      _
    $region15: #{kmeans_vqgan_emb_forward.1} parent=1 // pred_check_branch
      %23 = sbr.rel (0) target = $region17
    $region16: #{kmeans_vqgan_emb_forward.1} parent=1 // pred_region
      _
    $region17: #{kmeans_vqgan_emb_forward.1} parent=1 // pred_fallthru
      _
    // Predicated region
    $region18: #{kmeans_vqgan_emb_forward.1} parent=1 // pred_check
      _
    $region19: #{kmeans_vqgan_emb_forward.1} parent=1 // pred_check_branch
      %25 = sbr.rel (0) target = $region21
    $region20: #{kmeans_vqgan_emb_forward.1} parent=1 // pred_region
      _
    $region21: #{kmeans_vqgan_emb_forward.1} parent=1 // pred_fallthru
      _
    %v27 = vld [vmem:[%s0] sm:$0xff]
    %v28 = vld [vmem:[%s0 + $0x8] sm:$0xff]
    %v29 = vld [vmem:[%s1] sm:$0xff]
    %v30 = vld [vmem:[%s1 + $0x8] sm:$0xff]
    %v31 = vld [vmem:[%s1 + $0x10] sm:$0xff]
    %v32 = vld [vmem:[%s1 + $0x18] sm:$0xff]
    %vm33 = vcmask 261120
    %v35 = vsel %vm33, %v27, 0
    %v38 = vsel %vm33, %v28, 0
    %40 = vmatprep.subr.mxu0 0.0
    %41 = vmatpush1.msra.mxu0 0.0
    %42 = vmatprep.subr.mxu0 0.0
    %43 = vmatpush1.msra.mxu0 0.0
    %44 = vmatprep.subr.mxu0 0.0
    %45 = vmatpush1.msra.mxu0 0.0
    %46 = vmatprep.subr.mxu0 0.0
    %47 = vmatpush1.msra.mxu0 0.0
    %48 = vmatprep.subr.mxu0 0.0
    %49 = vmatpush1.msra.mxu0 0.0
    %50 = vmatprep.subr.mxu0 0.0
    %51 = vmatpush1.msra.mxu0 0.0
    %52 = vmatprep.subr.mxu0 0.0
    %53 = vmatpush1.msra.mxu0 0.0
    %54 = vmatprep.subr.mxu0 0.0
    %55 = vmatpush1.msra.mxu0 0.0
    %56 = vmatprep.subr.mxu0 0.0
    %57 = vmatpush1.msra.mxu0 0.0
    %58 = vmatprep.subr.mxu0 0.0
    %59 = vmatpush1.msra.mxu0 0.0
    %60 = vmatprep.subr.mxu0 0.0
    %61 = vmatpush1.msra.mxu0 0.0
    %62 = vmatprep.subr.mxu0 0.0
    %63 = vmatpush1.msra.mxu0 0.0
    %64 = vmatprep.subr.mxu0 0.0
    %65 = vmatpush1.msra.mxu0 %v32
    %66 = vmatprep.subr.mxu0 0.0
    %67 = vmatpush1.msra.mxu0 %v31
    %68 = vmatprep.subr.mxu0 0.0
    %69 = vmatpush1.msra.mxu0 %v30
    %70 = vmatprep.subr.mxu0 0.0
    %71 = vmatpush1.msra.mxu0 %v29
    %72 = vmatprep.subr.mxu0 0.0
    %73 = vmatpush2.msra.mxu0 0.0
    %74 = vmatprep.subr.mxu0 0.0
    %75 = vmatpush2.msra.mxu0 0.0
    %76 = vmatprep.subr.mxu0 0.0
    %77 = vmatpush2.msra.mxu0 0.0
    %78 = vmatprep.subr.mxu0 0.0
    %79 = vmatpush2.msra.mxu0 0.0
    %80 = vmatprep.subr.mxu0 0.0
    %81 = vmatpush2.msra.mxu0 0.0
    %82 = vmatprep.subr.mxu0 0.0
    %83 = vmatpush2.msra.mxu0 0.0
    %84 = vmatprep.subr.mxu0 0.0
    %85 = vmatpush2.msra.mxu0 0.0
    %86 = vmatprep.subr.mxu0 0.0
    %87 = vmatpush2.msra.mxu0 0.0
    %88 = vmatprep.subr.mxu0 0.0
    %89 = vmatpush2.msra.mxu0 0.0
    %90 = vmatprep.subr.mxu0 0.0
    %91 = vmatpush2.msra.mxu0 0.0
    %92 = vmatprep.subr.mxu0 0.0
    %93 = vmatpush2.msra.mxu0 0.0
    %94 = vmatprep.subr.mxu0 0.0
    %95 = vmatpush2.msra.mxu0 0.0
    %96 = vmatprep.subr.mxu0 0.0
    %97 = vmatpush2.msra.mxu0 0.0
    %98 = vmatprep.subr.mxu0 0.0
    %99 = vmatpush2.msra.mxu0 0.0
    %100 = vmatprep.subr.mxu0 0.0
    %101 = vmatpush2.msra.mxu0 0.0
    %102 = vmatprep.subr.mxu0 0.0
    %103 = vmatpush2.msra.mxu0 0.0
    %104 = vmatprep.mubr.f32.mxu0 0.0
    %105 = vmatmul.mubr.f32.gmra.mxu0 %v35
    %v106 = vpop.f32.mrf.mxu0
    %v107 = vadd.f32 0.0, %v106
    %v108 = vpop.f32.mrf.mxu0
    %109 = vmatprep.mubr.f32.mxu0 0.0
    %110 = vmatmul.mubr.f32.gmra.mxu0 %v38
    %v111 = vpop.f32.mrf.mxu0
    %v112 = vadd.f32 0.0, %v111
    %v113 = vpop.f32.mrf.mxu0
    %114 = vdwg.mxu0
    %v115 = vld [vmem:[%s2] sm:$0x1]
    %v117 = vlaneseq
    %v118 = vshrl.u32 %v117, 7
    %v119 = vsub.s32 0, %v118
    %v120 = vrot.slane %v115, %v119
    %v122 = vadd.f32 %v120, %v107
    %v123 = vadd.f32 %v120, %v112
    %vm124 = vcmask 523264
    %v125 = vsel %vm124, %v122, inf
    %126 = vmin.index.xlane.f32.xlu0 %v125
    %v127 = vpop.xlane.xlu0 %126
    %v128 = vsel %vm124, %v123, inf
    %129 = vmin.index.xlane.f32.xlu0 %v128
    %v130 = vpop.xlane.xlu0 %129
    %v131 = vlaneseq
    %v132 = vand.u32 %v131, 127
    %v133 = vlaneseq
    %v134 = vshrl.u32 %v133, 7
    %v135 = vsub.s32 %v132, %v134
    %v136 = vrot.slane %v127, %v135
    %v137 = vadd.s32 %v132, 4294967288
    %v138 = vlaneseq
    %v139 = vshrl.u32 %v138, 7
    %v140 = vsub.s32 %v137, %v139
    %v141 = vrot.slane %v130, %v140
    %vm142 = vcmask 130112
    %v143 = vsel %vm142, %v141, %v136
    %vm144 = vcmask 122880
    %145 = vst.msk [vmem:[%s7] sm:$0x1] %vm144, %v143
    %vm146 = vcmp.eq.s32.totalorder %v127, %v132
    %vm147 = vcmp.eq.s32.totalorder %v130, %v132
    %v148 = vsel %vm146, 1, 0
    %v149 = vsel %vm147, 1, 0
    %v150 = vcvt.s32.f32 %v148
    %v151 = vcvt.s32.f32 %v149
    %v152 = vld [vmem:[%s3] sm:$0xff]
    %v153 = vld [vmem:[%s3 + $0x8] sm:$0xff]
    %v154 = vld [vmem:[%s3 + $0x10] sm:$0xff]
    %v155 = vld [vmem:[%s3 + $0x18] sm:$0xff]
    %v156 = vld [vmem:[%s3 + $0x20] sm:$0xff]
    %v157 = vld [vmem:[%s3 + $0x28] sm:$0xff]
    %v158 = vld [vmem:[%s3 + $0x30] sm:$0xff]
    %v159 = vld [vmem:[%s3 + $0x38] sm:$0xff]
    %v161 = vsel %vm124, %v150, 0
    %v164 = vsel %vm124, %v151, 0
    %166 = vmatprep.subr.mxu0 0.0
    %167 = vmatpush1.msra.mxu0 0.0
    %168 = vmatprep.subr.mxu0 0.0
    %169 = vmatpush1.msra.mxu0 0.0
    %170 = vmatprep.subr.mxu0 0.0
    %171 = vmatpush1.msra.mxu0 0.0
    %172 = vmatprep.subr.mxu0 0.0
    %173 = vmatpush1.msra.mxu0 0.0
    %174 = vmatprep.subr.mxu0 0.0
    %175 = vmatpush1.msra.mxu0 0.0
    %176 = vmatprep.subr.mxu0 0.0
    %177 = vmatpush1.msra.mxu0 0.0
    %178 = vmatprep.subr.mxu0 0.0
    %179 = vmatpush1.msra.mxu0 0.0
    %180 = vmatprep.subr.mxu0 0.0
    %181 = vmatpush1.msra.mxu0 0.0
    %182 = vmatprep.subr.mxu0 0.0
    %183 = vmatpush1.msra.mxu0 %v159
    %184 = vmatprep.subr.mxu0 0.0
    %185 = vmatpush1.msra.mxu0 %v158
    %186 = vmatprep.subr.mxu0 0.0
    %187 = vmatpush1.msra.mxu0 %v157
    %188 = vmatprep.subr.mxu0 0.0
    %189 = vmatpush1.msra.mxu0 %v156
    %190 = vmatprep.subr.mxu0 0.0
    %191 = vmatpush1.msra.mxu0 %v155
    %192 = vmatprep.subr.mxu0 0.0
    %193 = vmatpush1.msra.mxu0 %v154
    %194 = vmatprep.subr.mxu0 0.0
    %195 = vmatpush1.msra.mxu0 %v153
    %196 = vmatprep.subr.mxu0 0.0
    %197 = vmatpush1.msra.mxu0 %v152
    %198 = vmatprep.subr.mxu0 0.0
    %199 = vmatpush2.msra.mxu0 0.0
    %200 = vmatprep.subr.mxu0 0.0
    %201 = vmatpush2.msra.mxu0 0.0
    %202 = vmatprep.subr.mxu0 0.0
    %203 = vmatpush2.msra.mxu0 0.0
    %204 = vmatprep.subr.mxu0 0.0
    %205 = vmatpush2.msra.mxu0 0.0
    %206 = vmatprep.subr.mxu0 0.0
    %207 = vmatpush2.msra.mxu0 0.0
    %208 = vmatprep.subr.mxu0 0.0
    %209 = vmatpush2.msra.mxu0 0.0
    %210 = vmatprep.subr.mxu0 0.0
    %211 = vmatpush2.msra.mxu0 0.0
    %212 = vmatprep.subr.mxu0 0.0
    %213 = vmatpush2.msra.mxu0 0.0
    %214 = vmatprep.subr.mxu0 0.0
    %215 = vmatpush2.msra.mxu0 0.0
    %216 = vmatprep.subr.mxu0 0.0
    %217 = vmatpush2.msra.mxu0 0.0
    %218 = vmatprep.subr.mxu0 0.0
    %219 = vmatpush2.msra.mxu0 0.0
    %220 = vmatprep.subr.mxu0 0.0
    %221 = vmatpush2.msra.mxu0 0.0
    %222 = vmatprep.subr.mxu0 0.0
    %223 = vmatpush2.msra.mxu0 0.0
    %224 = vmatprep.subr.mxu0 0.0
    %225 = vmatpush2.msra.mxu0 0.0
    %226 = vmatprep.subr.mxu0 0.0
    %227 = vmatpush2.msra.mxu0 0.0
    %228 = vmatprep.subr.mxu0 0.0
    %229 = vmatpush2.msra.mxu0 0.0
    %230 = vmatprep.mubr.f32.mxu0 0.0
    %231 = vmatmul.mubr.f32.gmra.mxu0 %v161
    %v232 = vpop.f32.mrf.mxu0
    %v233 = vadd.f32 0.0, %v232
    %v234 = vpop.f32.mrf.mxu0
    %235 = vmatprep.mubr.f32.mxu0 0.0
    %236 = vmatmul.mubr.f32.gmra.mxu0 %v164
    %v237 = vpop.f32.mrf.mxu0
    %v238 = vadd.f32 0.0, %v237
    %v239 = vpop.f32.mrf.mxu0
    %240 = vdwg.mxu0
    %241 = vst.msk [vmem:[#allocation2] sm:$0xff] %vm33, %v233
    %242 = vst.msk [vmem:[#allocation2 + $0x8] sm:$0xff] %vm33, %v238
    %v243 = vpack.c.bf16 %v151, %v150
    %v244 = vld [vmem:[%s4] sm:$0xf]
    %v245 = vld [vmem:[%s4 + $0x4] sm:$0xf]
    %v246 = vld [vmem:[%s4 + $0x8] sm:$0xf]
    %v247 = vld [vmem:[%s4 + $0xc] sm:$0xf]
    %v248 = vld [vmem:[%s4 + $0x10] sm:$0xf]
    %v249 = vld [vmem:[%s4 + $0x14] sm:$0xf]
    %v250 = vld [vmem:[%s4 + $0x18] sm:$0xf]
    %v251 = vld [vmem:[%s4 + $0x1c] sm:$0xf]
    %v260 = vunpack.c.l.b16 %v244
    %v261 = vunpack.c.l.b16 %v245
    %v262 = vunpack.c.l.b16 %v246
    %v263 = vunpack.c.l.b16 %v247
    %v264 = vunpack.c.l.b16 %v248
    %v265 = vunpack.c.l.b16 %v249
    %v266 = vunpack.c.l.b16 %v250
    %v267 = vunpack.c.l.b16 %v251
    %v268 = vpack.c.b16 %v261, %v260
    %v269 = vpack.c.b16 %v263, %v262
    %v270 = vpack.c.b16 %v265, %v264
    %v271 = vpack.c.b16 %v267, %v266
    %v277 = vsel %vm124, %v243, 0
    %279 = vmatprep.subr.bf16.mxu0 0
    %280 = vmatpush1.bf16.msra.mxu0 0
    %281 = vmatprep.subr.bf16.mxu0 0
    %282 = vmatpush1.bf16.msra.mxu0 0
    %283 = vmatprep.subr.bf16.mxu0 0
    %284 = vmatpush1.bf16.msra.mxu0 0
    %285 = vmatprep.subr.bf16.mxu0 0
    %286 = vmatpush1.bf16.msra.mxu0 0
    %287 = vmatprep.subr.bf16.mxu0 0
    %288 = vmatpush1.bf16.msra.mxu0 %v271
    %289 = vmatprep.subr.bf16.mxu0 0
    %290 = vmatpush1.bf16.msra.mxu0 %v270
    %291 = vmatprep.subr.bf16.mxu0 0
    %292 = vmatpush1.bf16.msra.mxu0 %v269
    %293 = vmatprep.subr.bf16.mxu0 0
    %294 = vmatpush1.bf16.msra.mxu0 %v268
    %295 = vmatprep.subr.bf16.mxu0 0
    %296 = vmatpush2.bf16.msra.mxu0 0
    %297 = vmatprep.subr.bf16.mxu0 0
    %298 = vmatpush2.bf16.msra.mxu0 0
    %299 = vmatprep.subr.bf16.mxu0 0
    %300 = vmatpush2.bf16.msra.mxu0 0
    %301 = vmatprep.subr.bf16.mxu0 0
    %302 = vmatpush2.bf16.msra.mxu0 0
    %303 = vmatprep.subr.bf16.mxu0 0
    %304 = vmatpush2.bf16.msra.mxu0 0
    %305 = vmatprep.subr.bf16.mxu0 0
    %306 = vmatpush2.bf16.msra.mxu0 0
    %307 = vmatprep.subr.bf16.mxu0 0
    %308 = vmatpush2.bf16.msra.mxu0 0
    %309 = vmatprep.subr.bf16.mxu0 0
    %310 = vmatpush2.bf16.msra.mxu0 0
    %311 = vmatprep.mubr.bf16.mxu0 0
    %312 = vmatmul.mubr.bf16.gmra.mxu0 %v277
    %v313 = vpop.f32.mrf.mxu0
    %v314 = vadd.f32 0.0, %v313
    %v315 = vpop.f32.mrf.mxu0
    %v316 = vpop.f32.mrf.mxu0
    %v317 = vadd.f32 0.0, %v316
    %v318 = vpop.f32.mrf.mxu0
    %319 = vdwg.mxu0
    %320 = vst.msk [vmem:[#allocation4] sm:$0xff] %vm33, %v314
    %321 = vst.msk [vmem:[#allocation4 + $0x8] sm:$0xff] %vm33, %v317
    %v322 = vsub.f32 %v233, %v27
    %v323 = vsub.f32 %v238, %v28
    %v324 = vmul.f32 %v322, %v322
    %v325 = vmul.f32 %v323, %v323
    %v326 = vsel %vm33, %v324, 0.0
    %327 = vadd.xlane.f32.xlu0 %v326
    %v328 = vpop.xlane.xlu0 %327
    %v329 = vsel %vm33, %v325, 0.0
    %330 = vadd.xlane.f32.xlu0 %v329
    %v331 = vpop.xlane.xlu0 %330
    %v334 = vlaneseq
    %v335 = vshrl.u32 %v334, 7
    %v336 = vsub.s32 %v132, %v335
    %v337 = vrot.slane %v328, %v336
    %v338 = vlaneseq
    %v339 = vshrl.u32 %v338, 7
    %v340 = vsub.s32 %v137, %v339
    %v341 = vrot.slane %v331, %v340
    %v342 = vsel %vm142, %v341, %v337
    %344 = vst.msk [vmem:[%s8] sm:$0x1] %vm144, %v342
    // Predicated region
    $region22: #{kmeans_vqgan_emb_forward.1} parent=1 // pred_check
      _
    $region23: #{kmeans_vqgan_emb_forward.1} parent=1 // pred_check_branch
      %346 = sbr.rel (0) target = $region25
    $region24: #{kmeans_vqgan_emb_forward.1} parent=1 // pred_region
      %s348 = ssub.s32 256, 256
      %349 = vsyncadd [#allocation3], %s348
      %s350 = sshll.u32 [#allocation2], 4
      %s351 = int_to_ptr.vmem [resolvable:$true] %s350
      %356 = dma.vmem_to_hbm [thread:$0]  %s351, 256, %s5, [#allocation3], 128, 128, 8
    $region25: #{kmeans_vqgan_emb_forward.1} parent=1 // pred_fallthru
      _
    // Predicated region
    $region26: #{kmeans_vqgan_emb_forward.1} parent=1 // pred_check
      _
    $region27: #{kmeans_vqgan_emb_forward.1} parent=1 // pred_check_branch
      %358 = sbr.rel (0) target = $region29
    $region28: #{kmeans_vqgan_emb_forward.1} parent=1 // pred_region
      %s360 = ssub.s32 256, 256
      %361 = vsyncadd [#allocation5], %s360
      %s362 = sshll.u32 [#allocation4], 4
      %s363 = int_to_ptr.vmem [resolvable:$true] %s362
      %368 = dma.vmem_to_hbm [thread:$0]  %s363, 256, %s6, [#allocation5], 128, 128, 8
    $region29: #{kmeans_vqgan_emb_forward.1} parent=1 // pred_fallthru
      _
    // Predicated region
    $region30: #{kmeans_vqgan_emb_forward.1} parent=1 // pred_check
      _
    $region31: #{kmeans_vqgan_emb_forward.1} parent=1 // pred_check_branch
      %370 = sbr.rel (0) target = $region33
    $region32: #{kmeans_vqgan_emb_forward.1} parent=1 // pred_region
      _
    $region33: #{kmeans_vqgan_emb_forward.1} parent=1 // pred_fallthru
      _
    // Predicated region
    $region34: #{kmeans_vqgan_emb_forward.1} parent=1 // pred_check
      _
    $region35: #{kmeans_vqgan_emb_forward.1} parent=1 // pred_check_branch
      %372 = sbr.rel (0) target = $region37
    $region36: #{kmeans_vqgan_emb_forward.1} parent=1 // pred_region
      _
    $region37: #{kmeans_vqgan_emb_forward.1} parent=1 // pred_fallthru
      _
    // Predicated region
    $region38: #{kmeans_vqgan_emb_forward.1} parent=1 // pred_check
      _
    $region39: #{kmeans_vqgan_emb_forward.1} parent=1 // pred_check_branch
      %374 = sbr.rel (0) target = $region41
    $region40: #{kmeans_vqgan_emb_forward.1} parent=1 // pred_region
      %375 = dma.done [#allocation3], 256
    $region41: #{kmeans_vqgan_emb_forward.1} parent=1 // pred_fallthru
      _
    // Predicated region
    $region42: #{kmeans_vqgan_emb_forward.1} parent=1 // pred_check
      _
    $region43: #{kmeans_vqgan_emb_forward.1} parent=1 // pred_check_branch
      %377 = sbr.rel (0) target = $region45
    $region44: #{kmeans_vqgan_emb_forward.1} parent=1 // pred_region
      %378 = dma.done [#allocation5], 256
    $region45: #{kmeans_vqgan_emb_forward.1} parent=1 // pred_fallthru
      _
    // Predicated region
    $region46: #{kmeans_vqgan_emb_forward.1} parent=1 // pred_check
      _
    $region47: #{kmeans_vqgan_emb_forward.1} parent=1 // pred_check_branch
      %380 = sbr.rel (0) target = $region49
    $region48: #{kmeans_vqgan_emb_forward.1} parent=1 // pred_region
      _
    $region49: #{kmeans_vqgan_emb_forward.1} parent=1 // pred_fallthru
      _
    // Predicated region
    $region50: #{kmeans_vqgan_emb_forward.1} parent=1 // pred_check
      _
    $region51: #{kmeans_vqgan_emb_forward.1} parent=1 // pred_check_branch
      %382 = sbr.rel (0) target = $region53
    $region52: #{kmeans_vqgan_emb_forward.1} parent=1 // pred_region
      _
    $region53: #{kmeans_vqgan_emb_forward.1} parent=1 // pred_fallthru
      _
    %383 = vsyncpa [#allocation3], 1
    %384 = vsyncpa [#allocation5], 1

// kernel: kmeans_vqgan_emb_forward.1
$region0: #{kmeans_vqgan_emb_forward.1}
  #allocation0 [shape = 'u32[]', space=smem, size = 0x4, offset = 0x4, fixed_abs, tag = 'smem constant byte address 0x4 - core index']
  #allocation1 [shape = 'u32[144,128]{1,0:T(1,128)}', space=vmem, size = 0x12000, scoped, tag = 'internal scratch']
  %s0 = inlined_call_operand.vmem [shape: f32[16,32], index: 0, kind: input, shape index: {}]
  %s1 = inlined_call_operand.vmem [shape: f32[32,64], index: 1, kind: input, shape index: {}]
  %s2 = inlined_call_operand.vmem [shape: f32[1,64], index: 2, kind: input, shape index: {}]
  %s3 = inlined_call_operand.vmem [shape: f32[64,32], index: 3, kind: input, shape index: {}]
  %s4 = inlined_call_operand.vmem [shape: bf16[64,32], index: 4, kind: input, shape index: {}]
  %s5 = inlined_call_operand.hbm [shape: f32[16,32], index: 5, kind: output, shape index: {0}]
  %s6 = inlined_call_operand.hbm [shape: f32[16,32], index: 6, kind: output, shape index: {1}]
  %s7 = inlined_call_operand.vmem [shape: s32[1,16], index: 7, kind: output, shape index: {2}]
  %s8 = inlined_call_operand.vmem [shape: f32[1,16], index: 8, kind: output, shape index: {3}]
  %9 = xla_tuple %s5, %s6, %s7, %s8
  %s10 = sld [smem:[#allocation0]]
  $region54: #{kmeans_vqgan_emb_forward.1} parent=0
    _
  %s12 = ssub.s32 1, %s10
  %s13 = scalar_select 0, %s12, %s10
  $region1: #{kmeans_vqgan_emb_forward.1} parent=0
    #allocation2 [shape = 'u8[8192]{0}', space=vmem, size = 0x2000, scoped, tag = 'output window, operand 0, single buffered']
    #allocation3 [shape = 's32[1]{0}', space=sflag, size = 0x4, scoped, tag = 'scoped memory for kmeans_vqgan_emb_forward.1']
    #allocation4 [shape = 'u8[8192]{0}', space=vmem, size = 0x2000, scoped, tag = 'output window, operand 1, single buffered']
    #allocation5 [shape = 's32[1]{0}', space=sflag, size = 0x4, scoped, tag = 'scoped memory for kmeans_vqgan_emb_forward.1']
    %14 = vsyncpa [#allocation3], 0
    %15 = vsyncpa [#allocation5], 0
    // Predicated region
    $region2: #{kmeans_vqgan_emb_forward.1} parent=1 // pred_check
      _
    $region3: #{kmeans_vqgan_emb_forward.1} parent=1 // pred_check_branch
      %17 = sbr.rel (0) target = $region5
    $region4: #{kmeans_vqgan_emb_forward.1} parent=1 // pred_region
      _
    $region5: #{kmeans_vqgan_emb_forward.1} parent=1 // pred_fallthru
      _
    // Predicated region
    $region6: #{kmeans_vqgan_emb_forward.1} parent=1 // pred_check
      _
    $region7: #{kmeans_vqgan_emb_forward.1} parent=1 // pred_check_branch
      %19 = sbr.rel (0) target = $region9
    $region8: #{kmeans_vqgan_emb_forward.1} parent=1 // pred_region
      _
    $region9: #{kmeans_vqgan_emb_forward.1} parent=1 // pred_fallthru
      _
    // Predicated region
    $region10: #{kmeans_vqgan_emb_forward.1} parent=1 // pred_check
      _
    $region11: #{kmeans_vqgan_emb_forward.1} parent=1 // pred_check_branch
      %21 = sbr.rel (0) target = $region13
    $region12: #{kmeans_vqgan_emb_forward.1} parent=1 // pred_region
      _
    $region13: #{kmeans_vqgan_emb_forward.1} parent=1 // pred_fallthru
      _
    // Predicated region
    $region14: #{kmeans_vqgan_emb_forward.1} parent=1 // pred_check
      _
    $region15: #{kmeans_vqgan_emb_forward.1} parent=1 // pred_check_branch
      %23 = sbr.rel (0) target = $region17
    $region16: #{kmeans_vqgan_emb_forward.1} parent=1 // pred_region
      _
    $region17: #{kmeans_vqgan_emb_forward.1} parent=1 // pred_fallthru
      _
    // Predicated region
    $region18: #{kmeans_vqgan_emb_forward.1} parent=1 // pred_check
      _
    $region19: #{kmeans_vqgan_emb_forward.1} parent=1 // pred_check_branch
      %25 = sbr.rel (0) target = $region21
    $region20: #{kmeans_vqgan_emb_forward.1} parent=1 // pred_region
      _
    $region21: #{kmeans_vqgan_emb_forward.1} parent=1 // pred_fallthru
      _
    %v27 = vld [vmem:[%s0] sm:$0xff]
    %v28 = vld [vmem:[%s0 + $0x8] sm:$0xff]
    %v29 = vld [vmem:[%s1] sm:$0xff]
    %v30 = vld [vmem:[%s1 + $0x8] sm:$0xff]
    %v31 = vld [vmem:[%s1 + $0x10] sm:$0xff]
    %v32 = vld [vmem:[%s1 + $0x18] sm:$0xff]
    %vm33 = vcmask 261120
    %v35 = vsel %vm33, %v27, 0
    %v38 = vsel %vm33, %v28, 0
    %40 = vmatprep.subr.mxu0 0.0
    %41 = vmatpush1.msra.mxu0 0.0
    %42 = vmatprep.subr.mxu0 0.0
    %43 = vmatpush1.msra.mxu0 0.0
    %44 = vmatprep.subr.mxu0 0.0
    %45 = vmatpush1.msra.mxu0 0.0
    %46 = vmatprep.subr.mxu0 0.0
    %47 = vmatpush1.msra.mxu0 0.0
    %48 = vmatprep.subr.mxu0 0.0
    %49 = vmatpush1.msra.mxu0 0.0
    %50 = vmatprep.subr.mxu0 0.0
    %51 = vmatpush1.msra.mxu0 0.0
    %52 = vmatprep.subr.mxu0 0.0
    %53 = vmatpush1.msra.mxu0 0.0
    %54 = vmatprep.subr.mxu0 0.0
    %55 = vmatpush1.msra.mxu0 0.0
    %56 = vmatprep.subr.mxu0 0.0
    %57 = vmatpush1.msra.mxu0 0.0
    %58 = vmatprep.subr.mxu0 0.0
    %59 = vmatpush1.msra.mxu0 0.0
    %60 = vmatprep.subr.mxu0 0.0
    %61 = vmatpush1.msra.mxu0 0.0
    %62 = vmatprep.subr.mxu0 0.0
    %63 = vmatpush1.msra.mxu0 0.0
    %64 = vmatprep.subr.mxu0 0.0
    %65 = vmatpush1.msra.mxu0 %v32
    %66 = vmatprep.subr.mxu0 0.0
    %67 = vmatpush1.msra.mxu0 %v31
    %68 = vmatprep.subr.mxu0 0.0
    %69 = vmatpush1.msra.mxu0 %v30
    %70 = vmatprep.subr.mxu0 0.0
    %71 = vmatpush1.msra.mxu0 %v29
    %72 = vmatprep.subr.mxu0 0.0
    %73 = vmatpush2.msra.mxu0 0.0
    %74 = vmatprep.subr.mxu0 0.0
    %75 = vmatpush2.msra.mxu0 0.0
    %76 = vmatprep.subr.mxu0 0.0
    %77 = vmatpush2.msra.mxu0 0.0
    %78 = vmatprep.subr.mxu0 0.0
    %79 = vmatpush2.msra.mxu0 0.0
    %80 = vmatprep.subr.mxu0 0.0
    %81 = vmatpush2.msra.mxu0 0.0
    %82 = vmatprep.subr.mxu0 0.0
    %83 = vmatpush2.msra.mxu0 0.0
    %84 = vmatprep.subr.mxu0 0.0
    %85 = vmatpush2.msra.mxu0 0.0
    %86 = vmatprep.subr.mxu0 0.0
    %87 = vmatpush2.msra.mxu0 0.0
    %88 = vmatprep.subr.mxu0 0.0
    %89 = vmatpush2.msra.mxu0 0.0
    %90 = vmatprep.subr.mxu0 0.0
    %91 = vmatpush2.msra.mxu0 0.0
    %92 = vmatprep.subr.mxu0 0.0
    %93 = vmatpush2.msra.mxu0 0.0
    %94 = vmatprep.subr.mxu0 0.0
    %95 = vmatpush2.msra.mxu0 0.0
    %96 = vmatprep.subr.mxu0 0.0
    %97 = vmatpush2.msra.mxu0 0.0
    %98 = vmatprep.subr.mxu0 0.0
    %99 = vmatpush2.msra.mxu0 0.0
    %100 = vmatprep.subr.mxu0 0.0
    %101 = vmatpush2.msra.mxu0 0.0
    %102 = vmatprep.subr.mxu0 0.0
    %103 = vmatpush2.msra.mxu0 0.0
    %104 = vmatprep.mubr.f32.mxu0 0.0
    %105 = vmatmul.mubr.f32.gmra.mxu0 %v35
    %v106 = vpop.f32.mrf.mxu0
    %v107 = vadd.f32 0.0, %v106
    %v108 = vpop.f32.mrf.mxu0
    %109 = vmatprep.mubr.f32.mxu0 0.0
    %110 = vmatmul.mubr.f32.gmra.mxu0 %v38
    %v111 = vpop.f32.mrf.mxu0
    %v112 = vadd.f32 0.0, %v111
    %v113 = vpop.f32.mrf.mxu0
    %114 = vdwg.mxu0
    %v115 = vld [vmem:[%s2] sm:$0x1]
    %v117 = vlaneseq
    %v118 = vshrl.u32 %v117, 7
    %v119 = vsub.s32 0, %v118
    %v120 = vrot.slane %v115, %v119
    %v122 = vadd.f32 %v120, %v107
    %v123 = vadd.f32 %v120, %v112
    %vm124 = vcmask 523264
    %v125 = vsel %vm124, %v122, inf
    %126 = vmin.index.xlane.f32.xlu0 %v125
    %v127 = vpop.xlane.xlu0 %126
    %v128 = vsel %vm124, %v123, inf
    %129 = vmin.index.xlane.f32.xlu0 %v128
    %v130 = vpop.xlane.xlu0 %129
    %v131 = vlaneseq
    %v132 = vand.u32 %v131, 127
    %v133 = vlaneseq
    %v134 = vshrl.u32 %v133, 7
    %v135 = vsub.s32 %v132, %v134
    %v136 = vrot.slane %v127, %v135
    %v137 = vadd.s32 %v132, 4294967288
    %v138 = vlaneseq
    %v139 = vshrl.u32 %v138, 7
    %v140 = vsub.s32 %v137, %v139
    %v141 = vrot.slane %v130, %v140
    %vm142 = vcmask 130112
    %v143 = vsel %vm142, %v141, %v136
    %vm144 = vcmask 122880
    %145 = vst.msk [vmem:[%s7] sm:$0x1] %vm144, %v143
    %vm146 = vcmp.eq.s32.totalorder %v127, %v132
    %vm147 = vcmp.eq.s32.totalorder %v130, %v132
    %v148 = vsel %vm146, 1, 0
    %v149 = vsel %vm147, 1, 0
    %v150 = vcvt.s32.f32 %v148
    %v151 = vcvt.s32.f32 %v149
    %v152 = vld [vmem:[%s3] sm:$0xff]
    %v153 = vld [vmem:[%s3 + $0x8] sm:$0xff]
    %v154 = vld [vmem:[%s3 + $0x10] sm:$0xff]
    %v155 = vld [vmem:[%s3 + $0x18] sm:$0xff]
    %v156 = vld [vmem:[%s3 + $0x20] sm:$0xff]
    %v157 = vld [vmem:[%s3 + $0x28] sm:$0xff]
    %v158 = vld [vmem:[%s3 + $0x30] sm:$0xff]
    %v159 = vld [vmem:[%s3 + $0x38] sm:$0xff]
    %v161 = vsel %vm124, %v150, 0
    %v164 = vsel %vm124, %v151, 0
    %166 = vmatprep.subr.mxu0 0.0
    %167 = vmatpush1.msra.mxu0 0.0
    %168 = vmatprep.subr.mxu0 0.0
    %169 = vmatpush1.msra.mxu0 0.0
    %170 = vmatprep.subr.mxu0 0.0
    %171 = vmatpush1.msra.mxu0 0.0
    %172 = vmatprep.subr.mxu0 0.0
    %173 = vmatpush1.msra.mxu0 0.0
    %174 = vmatprep.subr.mxu0 0.0
    %175 = vmatpush1.msra.mxu0 0.0
    %176 = vmatprep.subr.mxu0 0.0
    %177 = vmatpush1.msra.mxu0 0.0
    %178 = vmatprep.subr.mxu0 0.0
    %179 = vmatpush1.msra.mxu0 0.0
    %180 = vmatprep.subr.mxu0 0.0
    %181 = vmatpush1.msra.mxu0 0.0
    %182 = vmatprep.subr.mxu0 0.0
    %183 = vmatpush1.msra.mxu0 %v159
    %184 = vmatprep.subr.mxu0 0.0
    %185 = vmatpush1.msra.mxu0 %v158
    %186 = vmatprep.subr.mxu0 0.0
    %187 = vmatpush1.msra.mxu0 %v157
    %188 = vmatprep.subr.mxu0 0.0
    %189 = vmatpush1.msra.mxu0 %v156
    %190 = vmatprep.subr.mxu0 0.0
    %191 = vmatpush1.msra.mxu0 %v155
    %192 = vmatprep.subr.mxu0 0.0
    %193 = vmatpush1.msra.mxu0 %v154
    %194 = vmatprep.subr.mxu0 0.0
    %195 = vmatpush1.msra.mxu0 %v153
    %196 = vmatprep.subr.mxu0 0.0
    %197 = vmatpush1.msra.mxu0 %v152
    %198 = vmatprep.subr.mxu0 0.0
    %199 = vmatpush2.msra.mxu0 0.0
    %200 = vmatprep.subr.mxu0 0.0
    %201 = vmatpush2.msra.mxu0 0.0
    %202 = vmatprep.subr.mxu0 0.0
    %203 = vmatpush2.msra.mxu0 0.0
    %204 = vmatprep.subr.mxu0 0.0
    %205 = vmatpush2.msra.mxu0 0.0
    %206 = vmatprep.subr.mxu0 0.0
    %207 = vmatpush2.msra.mxu0 0.0
    %208 = vmatprep.subr.mxu0 0.0
    %209 = vmatpush2.msra.mxu0 0.0
    %210 = vmatprep.subr.mxu0 0.0
    %211 = vmatpush2.msra.mxu0 0.0
    %212 = vmatprep.subr.mxu0 0.0
    %213 = vmatpush2.msra.mxu0 0.0
    %214 = vmatprep.subr.mxu0 0.0
    %215 = vmatpush2.msra.mxu0 0.0
    %216 = vmatprep.subr.mxu0 0.0
    %217 = vmatpush2.msra.mxu0 0.0
    %218 = vmatprep.subr.mxu0 0.0
    %219 = vmatpush2.msra.mxu0 0.0
    %220 = vmatprep.subr.mxu0 0.0
    %221 = vmatpush2.msra.mxu0 0.0
    %222 = vmatprep.subr.mxu0 0.0
    %223 = vmatpush2.msra.mxu0 0.0
    %224 = vmatprep.subr.mxu0 0.0
    %225 = vmatpush2.msra.mxu0 0.0
    %226 = vmatprep.subr.mxu0 0.0
    %227 = vmatpush2.msra.mxu0 0.0
    %228 = vmatprep.subr.mxu0 0.0
    %229 = vmatpush2.msra.mxu0 0.0
    %230 = vmatprep.mubr.f32.mxu0 0.0
    %231 = vmatmul.mubr.f32.gmra.mxu0 %v161
    %v232 = vpop.f32.mrf.mxu0
    %v233 = vadd.f32 0.0, %v232
    %v234 = vpop.f32.mrf.mxu0
    %235 = vmatprep.mubr.f32.mxu0 0.0
    %236 = vmatmul.mubr.f32.gmra.mxu0 %v164
    %v237 = vpop.f32.mrf.mxu0
    %v238 = vadd.f32 0.0, %v237
    %v239 = vpop.f32.mrf.mxu0
    %240 = vdwg.mxu0
    %241 = vst.msk [vmem:[#allocation2] sm:$0xff] %vm33, %v233
    %242 = vst.msk [vmem:[#allocation2 + $0x8] sm:$0xff] %vm33, %v238
    %v243 = vpack.c.bf16 %v151, %v150
    %v244 = vld [vmem:[%s4] sm:$0xf]
    %v245 = vld [vmem:[%s4 + $0x4] sm:$0xf]
    %v246 = vld [vmem:[%s4 + $0x8] sm:$0xf]
    %v247 = vld [vmem:[%s4 + $0xc] sm:$0xf]
    %v248 = vld [vmem:[%s4 + $0x10] sm:$0xf]
    %v249 = vld [vmem:[%s4 + $0x14] sm:$0xf]
    %v250 = vld [vmem:[%s4 + $0x18] sm:$0xf]
    %v251 = vld [vmem:[%s4 + $0x1c] sm:$0xf]
    %v260 = vunpack.c.l.b16 %v244
    %v261 = vunpack.c.l.b16 %v245
    %v262 = vunpack.c.l.b16 %v246
    %v263 = vunpack.c.l.b16 %v247
    %v264 = vunpack.c.l.b16 %v248
    %v265 = vunpack.c.l.b16 %v249
    %v266 = vunpack.c.l.b16 %v250
    %v267 = vunpack.c.l.b16 %v251
    %v268 = vpack.c.b16 %v261, %v260
    %v269 = vpack.c.b16 %v263, %v262
    %v270 = vpack.c.b16 %v265, %v264
    %v271 = vpack.c.b16 %v267, %v266
    %v277 = vsel %vm124, %v243, 0
    %279 = vmatprep.subr.bf16.mxu0 0
    %280 = vmatpush1.bf16.msra.mxu0 0
    %281 = vmatprep.subr.bf16.mxu0 0
    %282 = vmatpush1.bf16.msra.mxu0 0
    %283 = vmatprep.subr.bf16.mxu0 0
    %284 = vmatpush1.bf16.msra.mxu0 0
    %285 = vmatprep.subr.bf16.mxu0 0
    %286 = vmatpush1.bf16.msra.mxu0 0
    %287 = vmatprep.subr.bf16.mxu0 0
    %288 = vmatpush1.bf16.msra.mxu0 %v271
    %289 = vmatprep.subr.bf16.mxu0 0
    %290 = vmatpush1.bf16.msra.mxu0 %v270
    %291 = vmatprep.subr.bf16.mxu0 0
    %292 = vmatpush1.bf16.msra.mxu0 %v269
    %293 = vmatprep.subr.bf16.mxu0 0
    %294 = vmatpush1.bf16.msra.mxu0 %v268
    %295 = vmatprep.subr.bf16.mxu0 0
    %296 = vmatpush2.bf16.msra.mxu0 0
    %297 = vmatprep.subr.bf16.mxu0 0
    %298 = vmatpush2.bf16.msra.mxu0 0
    %299 = vmatprep.subr.bf16.mxu0 0
    %300 = vmatpush2.bf16.msra.mxu0 0
    %301 = vmatprep.subr.bf16.mxu0 0
    %302 = vmatpush2.bf16.msra.mxu0 0
    %303 = vmatprep.subr.bf16.mxu0 0
    %304 = vmatpush2.bf16.msra.mxu0 0
    %305 = vmatprep.subr.bf16.mxu0 0
    %306 = vmatpush2.bf16.msra.mxu0 0
    %307 = vmatprep.subr.bf16.mxu0 0
    %308 = vmatpush2.bf16.msra.mxu0 0
    %309 = vmatprep.subr.bf16.mxu0 0
    %310 = vmatpush2.bf16.msra.mxu0 0
    %311 = vmatprep.mubr.bf16.mxu0 0
    %312 = vmatmul.mubr.bf16.gmra.mxu0 %v277
    %v313 = vpop.f32.mrf.mxu0
    %v314 = vadd.f32 0.0, %v313
    %v315 = vpop.f32.mrf.mxu0
    %v316 = vpop.f32.mrf.mxu0
    %v317 = vadd.f32 0.0, %v316
    %v318 = vpop.f32.mrf.mxu0
    %319 = vdwg.mxu0
    %320 = vst.msk [vmem:[#allocation4] sm:$0xff] %vm33, %v314
    %321 = vst.msk [vmem:[#allocation4 + $0x8] sm:$0xff] %vm33, %v317
    %v322 = vsub.f32 %v233, %v27
    %v323 = vsub.f32 %v238, %v28
    %v324 = vmul.f32 %v322, %v322
    %v325 = vmul.f32 %v323, %v323
    %v326 = vsel %vm33, %v324, 0.0
    %327 = vadd.xlane.f32.xlu0 %v326
    %v328 = vpop.xlane.xlu0 %327
    %v329 = vsel %vm33, %v325, 0.0
    %330 = vadd.xlane.f32.xlu0 %v329
    %v331 = vpop.xlane.xlu0 %330
    %v334 = vlaneseq
    %v335 = vshrl.u32 %v334, 7
    %v336 = vsub.s32 %v132, %v335
    %v337 = vrot.slane %v328, %v336
    %v338 = vlaneseq
    %v339 = vshrl.u32 %v338, 7
    %v340 = vsub.s32 %v137, %v339
    %v341 = vrot.slane %v331, %v340
    %v342 = vsel %vm142, %v341, %v337
    %344 = vst.msk [vmem:[%s8] sm:$0x1] %vm144, %v342
    // Predicated region
    $region22: #{kmeans_vqgan_emb_forward.1} parent=1 // pred_check
      _
    $region23: #{kmeans_vqgan_emb_forward.1} parent=1 // pred_check_branch
      %346 = sbr.rel (0) target = $region25
    $region24: #{kmeans_vqgan_emb_forward.1} parent=1 // pred_region
      %s348 = ssub.s32 256, 256
      %349 = vsyncadd [#allocation3], %s348
      %s350 = sshll.u32 [#allocation2], 4
      %s351 = int_to_ptr.vmem [resolvable:$true] %s350
      %356 = dma.vmem_to_hbm [thread:$0]  %s351, 256, %s5, [#allocation3], 128, 128, 8
    $region25: #{kmeans_vqgan_emb_forward.1} parent=1 // pred_fallthru
      _
    // Predicated region
    $region26: #{kmeans_vqgan_emb_forward.1} parent=1 // pred_check
      _
    $region27: #{kmeans_vqgan_emb_forward.1} parent=1 // pred_check_branch
      %358 = sbr.rel (0) target = $region29
    $region28: #{kmeans_vqgan_emb_forward.1} parent=1 // pred_region
      %s360 = ssub.s32 256, 256
      %361 = vsyncadd [#allocation5], %s360
      %s362 = sshll.u32 [#allocation4], 4
      %s363 = int_to_ptr.vmem [resolvable:$true] %s362
      %368 = dma.vmem_to_hbm [thread:$0]  %s363, 256, %s6, [#allocation5], 128, 128, 8
    $region29: #{kmeans_vqgan_emb_forward.1} parent=1 // pred_fallthru
      _
    // Predicated region
    $region30: #{kmeans_vqgan_emb_forward.1} parent=1 // pred_check
      _
    $region31: #{kmeans_vqgan_emb_forward.1} parent=1 // pred_check_branch
      %370 = sbr.rel (0) target = $region33
    $region32: #{kmeans_vqgan_emb_forward.1} parent=1 // pred_region
      _
    $region33: #{kmeans_vqgan_emb_forward.1} parent=1 // pred_fallthru
      _
    // Predicated region
    $region34: #{kmeans_vqgan_emb_forward.1} parent=1 // pred_check
      _
    $region35: #{kmeans_vqgan_emb_forward.1} parent=1 // pred_check_branch
      %372 = sbr.rel (0) target = $region37
    $region36: #{kmeans_vqgan_emb_forward.1} parent=1 // pred_region
      _
    $region37: #{kmeans_vqgan_emb_forward.1} parent=1 // pred_fallthru
      _
    // Predicated region
    $region38: #{kmeans_vqgan_emb_forward.1} parent=1 // pred_check
      _
    $region39: #{kmeans_vqgan_emb_forward.1} parent=1 // pred_check_branch
      %374 = sbr.rel (0) target = $region41
    $region40: #{kmeans_vqgan_emb_forward.1} parent=1 // pred_region
      %375 = dma.done [#allocation3], 256
    $region41: #{kmeans_vqgan_emb_forward.1} parent=1 // pred_fallthru
      _
    // Predicated region
    $region42: #{kmeans_vqgan_emb_forward.1} parent=1 // pred_check
      _
    $region43: #{kmeans_vqgan_emb_forward.1} parent=1 // pred_check_branch
      %377 = sbr.rel (0) target = $region45
    $region44: #{kmeans_vqgan_emb_forward.1} parent=1 // pred_region
      %378 = dma.done [#allocation5], 256
    $region45: #{kmeans_vqgan_emb_forward.1} parent=1 // pred_fallthru
      _
    // Predicated region
    $region46: #{kmeans_vqgan_emb_forward.1} parent=1 // pred_check
      _
    $region47: #{kmeans_vqgan_emb_forward.1} parent=1 // pred_check_branch
      %380 = sbr.rel (0) target = $region49
    $region48: #{kmeans_vqgan_emb_forward.1} parent=1 // pred_region
      _
    $region49: #{kmeans_vqgan_emb_forward.1} parent=1 // pred_fallthru
      _
    // Predicated region
    $region50: #{kmeans_vqgan_emb_forward.1} parent=1 // pred_check
      _
    $region51: #{kmeans_vqgan_emb_forward.1} parent=1 // pred_check_branch
      %382 = sbr.rel (0) target = $region53
    $region52: #{kmeans_vqgan_emb_forward.1} parent=1 // pred_region
      _
    $region53: #{kmeans_vqgan_emb_forward.1} parent=1 // pred_fallthru
      _
    %383 = vsyncpa [#allocation3], 1
    %384 = vsyncpa [#allocation5], 1

</llo_original>
